<compile_context>
chip_gen: v7x
topology: tpu7x:2x2x1
jax: 0.10.0
libtpu: 0.0.40
codegen_flags: <defaults>
</compile_context>

<pallas_src>
import jax
import jax.numpy as jnp
from jax import lax
from jax.experimental import pallas as pl
from jax.experimental.pallas import tpu as pltpu

# ----------------------------- problem sizes ------------------------------
B, C, H, W = 2, 4, 16, 16      # input (NCHW on the PyTorch side)
F = 32                         # features per expert
E = 2                          # number of experts in the ensemble
NUM_CLASSES = 10               # classifier width
KH = KW = 3                    # conv kernel


# --------------------- Pallas kernel: fused full forward -------------------
def _fused_kernel(p_ref, w_ref, b_ref, pool_ref, wc_ref, bc_ref, o_ref):
    # p_ref   : [9*C, B*H*W]   im2col'd input; pixels (512) on the lane axis
    # w_ref   : [D, 9*C]       stacked expert conv weights, D = E*F
    # b_ref   : [D, 1]         stacked conv biases
    # pool_ref: [B*H*W, B]     block-constant pooling matrix, entries 1/(H*W)
    # wc_ref  : [NC, D]        classifier weight (torch layout)
    # bc_ref  : [NC, 1]        classifier bias
    # o_ref   : [NC, B]        transposed logits
    #
    # Conv for ALL experts as ONE MXU matmul; accumulator (D, 512) is lane-dense.
    acc = jnp.dot(w_ref[...], p_ref[...], preferred_element_type=jnp.float32)
    acc = jnp.maximum(acc + b_ref[...], 0.0)            # bias + ReLU, in place on acc

    # Global average pool as a second MXU matmul (1/HW folded into pool_ref):
    # feat^T = relu(conv) @ pool  ->  (D, B)
    feat_t = jnp.dot(acc, pool_ref[...], preferred_element_type=jnp.float32)

    # Classifier inside the same kernel: logits^T = Wc @ feat^T + bc
    o_ref[...] = (jnp.dot(wc_ref[...], feat_t, preferred_element_type=jnp.float32)
                  + bc_ref[...])


# ----------------------- one-time parameter repacking ----------------------
def prepare_params(params):
    """Hoisted out of the forward path: stack/reshape weights once."""
    w_rows, b_rows = [], []
    for (w_oihw, bias) in params["experts"]:
        fx, cx = w_oihw.shape[0], w_oihw.shape[1]
        # row index = (kh*3 + kw)*C + c  (matches the im2col row layout below)
        w_rows.append(jnp.transpose(w_oihw, (0, 2, 3, 1)).reshape(fx, KH * KW * cx))
        b_rows.append(bias)
    w_all = jnp.concatenate(w_rows, axis=0)                    # (E*F, 9*C)
    b_all = jnp.concatenate(b_rows, axis=0).reshape(-1, 1)     # (E*F, 1)
    wc, bc = params["classifier"]                              # (NC, E*F), (NC,)
    # Pooling matrix: (B*H*W, B), pool[i, b] = 1/(H*W) if pixel i belongs to image b.
    hw = H * W
    pool = jnp.repeat(jnp.eye(B, dtype=jnp.float32), hw, axis=0) / float(hw)
    return {"w_all": w_all, "b_all": b_all, "pool": pool,
            "wc": wc, "bc": bc.reshape(-1, 1)}


def _im2col_t(x_nchw):
    """[B,C,H,W] -> [9*C, B*H*W] patch matrix (pixels on the trailing/lane axis).

    One small transpose of the raw input only; no transpose of the 9x-stacked tensor.
    """
    bx, cx, hx, wx = x_nchw.shape
    x_cbhw = jnp.transpose(x_nchw, (1, 0, 2, 3))               # (C, B, H, W)
    xp = jnp.pad(x_cbhw, ((0, 0), (0, 0), (1, 1), (1, 1)))     # zero pad = SAME
    taps = []
    for kh in range(KH):
        for kw in range(KW):
            taps.append(xp[:, :, kh:kh + hx, kw:kw + wx])      # (C, B, H, W)
    pat = jnp.stack(taps, axis=0)                               # (9, C, B, H, W)
    return pat.reshape(KH * KW * cx, bx * hx * wx)              # row = tap*C + c


# ------------------------------ full forward -------------------------------
def model_forward(x_nchw, prepped):
    """Equivalent of Model.forward(x) -> EnModel(x): expert features -> logits."""
    bx = x_nchw.shape[0]
    patches = _im2col_t(x_nchw)                                 # (9*C, B*H*W)

    w_all, b_all = prepped["w_all"], prepped["b_all"]
    pool = prepped["pool"]
    wc, bc = prepped["wc"], prepped["bc"]
    d = w_all.shape[0]
    nc = wc.shape[0]
    k = patches.shape[0]
    m = patches.shape[1]

    logits_t = pl.pallas_call(
        _fused_kernel,
        out_shape=jax.ShapeDtypeStruct((nc, bx), jnp.float32),
        grid_spec=pltpu.PrefetchScalarGridSpec(
            num_scalar_prefetch=0,
            grid=(1,),                         # single step: whole problem fits VMEM
            in_specs=[
                pl.BlockSpec((k, m), lambda i: (0, 0)),
                pl.BlockSpec((d, k), lambda i: (0, 0)),
                pl.BlockSpec((d, 1), lambda i: (0, 0)),
                pl.BlockSpec((m, bx), lambda i: (0, 0)),
                pl.BlockSpec((nc, d), lambda i: (0, 0)),
                pl.BlockSpec((nc, 1), lambda i: (0, 0)),
            ],
            out_specs=pl.BlockSpec((nc, bx), lambda i: (0, 0)),
        ),
        compiler_params=pltpu.CompilerParams(
            dimension_semantics=("arbitrary",)),
    )(patches, w_all, b_all, pool, wc, bc)
    return logits_t.T                                            # (B, NUM_CLASSES)


# -------------------------- pure-JAX reference -----------------------------
def reference_forward(x_nchw, params):
    feats = []
    for (w_oihw, bias) in params["experts"]:
        y = lax.conv_general_dilated(
            x_nchw, w_oihw, window_strides=(1, 1), padding="SAME",
            dimension_numbers=("NCHW", "OIHW", "NCHW"))
        y = jnp.maximum(y + bias[None, :, None, None], 0.0)
        feats.append(jnp.mean(y, axis=(2, 3)))
    feat = jnp.concatenate(feats, axis=1)
    wc, bc = params["classifier"]
    return feat @ wc.T + bc


# --------------------------------- main ------------------------------------
if __name__ == "__main__":
    key = jax.random.PRNGKey(0)
    k_x, *k_p = jax.random.split(key, 2 + 2 * E + 2)

    x = jax.random.normal(k_x, (B, C, H, W), dtype=jnp.float32)

    experts = []
    for e in range(E):
        w = 0.1 * jax.random.normal(k_p[2 * e], (F, C, 3, 3), dtype=jnp.float32)
        b = 0.05 * jax.random.normal(k_p[2 * e + 1], (F,), dtype=jnp.float32)
        experts.append((w, b))
    wc = 0.1 * jax.random.normal(k_p[2 * E], (NUM_CLASSES, E * F),
                                 dtype=jnp.float32)
    bc = 0.05 * jax.random.normal(k_p[2 * E + 1], (NUM_CLASSES,),
                                  dtype=jnp.float32)
    params = {"experts": experts, "classifier": (wc, bc)}

    prepped = prepare_params(params)      # one-time weight repacking (not per-forward)
    fwd = jax.jit(model_forward)

    out = jax.block_until_ready(fwd(x, prepped))
    ref = jax.block_until_ready(reference_forward(x, params))

    assert out.shape == (B, NUM_CLASSES), out.shape
    max_err = float(jnp.max(jnp.abs(out - ref)))
    assert jnp.allclose(out, ref, atol=5e-4, rtol=5e-4), max_err

    # TODO(synk): param_groups/freeze/reset/get_dict/set_dict are training &
    # checkpointing utilities with no forward-pass kernel equivalent.
    print("KERNEL_OK")
</pallas_src>

<mosaic_0001>
module attributes {stable_mosaic.version = 11 : i64} {
  func.func @_fused_kernel(%arg0: i32, %arg1: memref<36x512xf32, #tpu.memory_space<vmem>>, %arg2: memref<64x36xf32, #tpu.memory_space<vmem>>, %arg3: memref<64x1xf32, #tpu.memory_space<vmem>>, %arg4: memref<512x2xf32, #tpu.memory_space<vmem>>, %arg5: memref<10x64xf32, #tpu.memory_space<vmem>>, %arg6: memref<10x1xf32, #tpu.memory_space<vmem>>, %arg7: memref<10x2xf32, #tpu.memory_space<vmem>>) attributes {dimension_semantics = [#tpu.dimension_semantics<arbitrary>], iteration_bounds = array<i64: 1>, scalar_prefetch = 0 : i64, scratch_operands = 0 : i64, tpu.core_type = #tpu.core_type<tc>, window_params = [{pipeline_mode = #tpu.pipeline_mode<synchronous>, transform_indices = @transform_0, window_bounds = array<i64: 36, 512>}, {pipeline_mode = #tpu.pipeline_mode<synchronous>, transform_indices = @transform_1, window_bounds = array<i64: 64, 36>}, {pipeline_mode = #tpu.pipeline_mode<synchronous>, transform_indices = @transform_2, window_bounds = array<i64: 64, 1>}, {pipeline_mode = #tpu.pipeline_mode<synchronous>, transform_indices = @transform_3, window_bounds = array<i64: 512, 2>}, {pipeline_mode = #tpu.pipeline_mode<synchronous>, transform_indices = @transform_4, window_bounds = array<i64: 10, 64>}, {pipeline_mode = #tpu.pipeline_mode<synchronous>, transform_indices = @transform_5, window_bounds = array<i64: 10, 1>}, {pipeline_mode = #tpu.pipeline_mode<synchronous>, transform_indices = @transform_6, window_bounds = array<i64: 10, 2>}]} {
    %c0 = arith.constant 0 : index
    %c0_0 = arith.constant 0 : index
    %0 = vector.load %arg2[%c0, %c0_0] : memref<64x36xf32, #tpu.memory_space<vmem>>, vector<64x36xf32>
    %c0_1 = arith.constant 0 : index
    %c0_2 = arith.constant 0 : index
    %1 = vector.load %arg1[%c0_1, %c0_2] : memref<36x512xf32, #tpu.memory_space<vmem>>, vector<36x512xf32>
    %cst = arith.constant dense<0.000000e+00> : vector<64x512xf32>
    %2 = tpu.matmul %0, %1, %cst {dimension_numbers = #tpu.dot_dimension_numbers<[1], [0], [0], [1], [0, 0, 1, 1], [], []>} : vector<64x36xf32>, vector<36x512xf32>, vector<64x512xf32> -> vector<64x512xf32>
    %c0_3 = arith.constant 0 : index
    %c0_4 = arith.constant 0 : index
    %3 = vector.load %arg3[%c0_3, %c0_4] : memref<64x1xf32, #tpu.memory_space<vmem>>, vector<64x1xf32>
    %4 = vector.broadcast %3 : vector<64x1xf32> to vector<64x512xf32>
    %5 = arith.addf %2, %4 : vector<64x512xf32>
    %cst_5 = arith.constant 0.000000e+00 : f32
    %6 = vector.broadcast %cst_5 : f32 to vector<64x512xf32>
    %7 = arith.maximumf %5, %6 : vector<64x512xf32>
    %c0_6 = arith.constant 0 : index
    %c0_7 = arith.constant 0 : index
    %8 = vector.load %arg4[%c0_6, %c0_7] : memref<512x2xf32, #tpu.memory_space<vmem>>, vector<512x2xf32>
    %cst_8 = arith.constant dense<0.000000e+00> : vector<64x2xf32>
    %9 = tpu.matmul %7, %8, %cst_8 {dimension_numbers = #tpu.dot_dimension_numbers<[1], [0], [0], [1], [0, 0, 1, 1], [], []>} : vector<64x512xf32>, vector<512x2xf32>, vector<64x2xf32> -> vector<64x2xf32>
    %c0_9 = arith.constant 0 : index
    %c0_10 = arith.constant 0 : index
    %10 = vector.load %arg5[%c0_9, %c0_10] : memref<10x64xf32, #tpu.memory_space<vmem>>, vector<10x64xf32>
    %cst_11 = arith.constant dense<0.000000e+00> : vector<10x2xf32>
    %11 = tpu.matmul %10, %9, %cst_11 {dimension_numbers = #tpu.dot_dimension_numbers<[1], [0], [0], [1], [0, 0, 1, 1], [], []>} : vector<10x64xf32>, vector<64x2xf32>, vector<10x2xf32> -> vector<10x2xf32>
    %c0_12 = arith.constant 0 : index
    %c0_13 = arith.constant 0 : index
    %12 = vector.load %arg6[%c0_12, %c0_13] : memref<10x1xf32, #tpu.memory_space<vmem>>, vector<10x1xf32>
    %13 = vector.broadcast %12 : vector<10x1xf32> to vector<10x2xf32>
    %14 = arith.addf %11, %13 : vector<10x2xf32>
    %c0_14 = arith.constant 0 : index
    %c0_15 = arith.constant 0 : index
    %15 = vector.load %arg7[%c0_14, %c0_15] : memref<10x2xf32, #tpu.memory_space<vmem>>, vector<10x2xf32>
    tpu.vector_store %arg7[%c0_14, %c0_15], %14 {strides = array<i32>} : memref<10x2xf32, #tpu.memory_space<vmem>>, vector<10x2xf32>,
    return
  }
  func.func @transform_0(%arg0: i32) -> (i32, i32) {
    %c0_i32 = arith.constant 0 : i32
    %c0_i32_0 = arith.constant 0 : i32
    %c0_i32_1 = arith.constant 0 : i32
    return %c0_i32, %c0_i32_0 : i32, i32
  }
  func.func @transform_1(%arg0: i32) -> (i32, i32) {
    %c0_i32 = arith.constant 0 : i32
    %c0_i32_0 = arith.constant 0 : i32
    %c0_i32_1 = arith.constant 0 : i32
    return %c0_i32, %c0_i32_0 : i32, i32
  }
  func.func @transform_2(%arg0: i32) -> (i32, i32) {
    %c0_i32 = arith.constant 0 : i32
    %c0_i32_0 = arith.constant 0 : i32
    %c0_i32_1 = arith.constant 0 : i32
    return %c0_i32, %c0_i32_0 : i32, i32
  }
  func.func @transform_3(%arg0: i32) -> (i32, i32) {
    %c0_i32 = arith.constant 0 : i32
    %c0_i32_0 = arith.constant 0 : i32
    %c0_i32_1 = arith.constant 0 : i32
    return %c0_i32, %c0_i32_0 : i32, i32
  }
  func.func @transform_4(%arg0: i32) -> (i32, i32) {
    %c0_i32 = arith.constant 0 : i32
    %c0_i32_0 = arith.constant 0 : i32
    %c0_i32_1 = arith.constant 0 : i32
    return %c0_i32, %c0_i32_0 : i32, i32
  }
  func.func @transform_5(%arg0: i32) -> (i32, i32) {
    %c0_i32 = arith.constant 0 : i32
    %c0_i32_0 = arith.constant 0 : i32
    %c0_i32_1 = arith.constant 0 : i32
    return %c0_i32, %c0_i32_0 : i32, i32
  }
  func.func @transform_6(%arg0: i32) -> (i32, i32) {
    %c0_i32 = arith.constant 0 : i32
    %c0_i32_0 = arith.constant 0 : i32
    %c0_i32_1 = arith.constant 0 : i32
    return %c0_i32, %c0_i32_0 : i32, i32
  }
}

</mosaic_0001>

<llo_original>
// kernel: model_forward.1
$region0: #{model_forward.1}
  #allocation0 [shape = 'u32[]', space=smem, size = 0x4, offset = 0x4, fixed_abs, tag = 'smem constant byte address 0x4 - core index']
  #allocation1 [shape = 'u32[144,128]{1,0:T(1,128)}', space=vmem, size = 0x12000, scoped, tag = 'internal scratch']
  %s0 = inlined_call_operand.vmem [shape: f32[36,512], index: 0, kind: input, shape index: {}]
  %s1 = inlined_call_operand.vmem [shape: f32[64,36], index: 1, kind: input, shape index: {}]
  %s2 = inlined_call_operand.vmem [shape: f32[64,1], index: 2, kind: input, shape index: {}]
  %s3 = inlined_call_operand.vmem [shape: f32[512,2], index: 3, kind: input, shape index: {}]
  %s4 = inlined_call_operand.vmem [shape: f32[10,64], index: 4, kind: input, shape index: {}]
  %s5 = inlined_call_operand.vmem [shape: f32[10,1], index: 5, kind: input, shape index: {}]
  %s6 = inlined_call_operand.vmem [shape: f32[10,2], index: 6, kind: output, shape index: {}]
  %s7 = sld [smem:[#allocation0]]
  $region34: #{model_forward.1} parent=0
    _
  %s9 = ssub.s32 1, %s7
  %s10 = scalar_select 0, %s9, %s7
  // Predicated region
  $region2: #{model_forward.1} parent=0 // pred_check
    _
  $region3: #{model_forward.1} parent=0 // pred_check_branch
    %12 = sbr.rel (0) target = $region5
  $region4: #{model_forward.1} parent=0 // pred_region
    _
  $region5: #{model_forward.1} parent=0 // pred_fallthru
    _
  // Predicated region
  $region6: #{model_forward.1} parent=0 // pred_check
    _
  $region7: #{model_forward.1} parent=0 // pred_check_branch
    %14 = sbr.rel (0) target = $region9
  $region8: #{model_forward.1} parent=0 // pred_region
    _
  $region9: #{model_forward.1} parent=0 // pred_fallthru
    _
  // Predicated region
  $region10: #{model_forward.1} parent=0 // pred_check
    _
  $region11: #{model_forward.1} parent=0 // pred_check_branch
    %16 = sbr.rel (0) target = $region13
  $region12: #{model_forward.1} parent=0 // pred_region
    _
  $region13: #{model_forward.1} parent=0 // pred_fallthru
    _
  // Predicated region
  $region14: #{model_forward.1} parent=0 // pred_check
    _
  $region15: #{model_forward.1} parent=0 // pred_check_branch
    %18 = sbr.rel (0) target = $region17
  $region16: #{model_forward.1} parent=0 // pred_region
    _
  $region17: #{model_forward.1} parent=0 // pred_fallthru
    _
  // Predicated region
  $region18: #{model_forward.1} parent=0 // pred_check
    _
  $region19: #{model_forward.1} parent=0 // pred_check_branch
    %20 = sbr.rel (0) target = $region21
  $region20: #{model_forward.1} parent=0 // pred_region
    _
  $region21: #{model_forward.1} parent=0 // pred_fallthru
    _
  // Predicated region
  $region22: #{model_forward.1} parent=0 // pred_check
    _
  $region23: #{model_forward.1} parent=0 // pred_check_branch
    %22 = sbr.rel (0) target = $region25
  $region24: #{model_forward.1} parent=0 // pred_region
    _
  $region25: #{model_forward.1} parent=0 // pred_fallthru
    _
  %v23 = vld [vmem:[%s1] sm:$0xff]
  %v24 = vld [vmem:[%s1 + $0x8] sm:$0xff]
  %v25 = vld [vmem:[%s1 + $0x10] sm:$0xff]
  %v26 = vld [vmem:[%s1 + $0x18] sm:$0xff]
  %v27 = vld [vmem:[%s1 + $0x20] sm:$0xff]
  %v28 = vld [vmem:[%s1 + $0x28] sm:$0xff]
  %v29 = vld [vmem:[%s1 + $0x30] sm:$0xff]
  %v30 = vld [vmem:[%s1 + $0x38] sm:$0xff]
  %v31 = vld [vmem:[%s0] sm:$0xff]
  %v32 = vld [vmem:[%s0 + $0x8] sm:$0xff]
  %v33 = vld [vmem:[%s0 + $0x10] sm:$0xff]
  %v34 = vld [vmem:[%s0 + $0x18] sm:$0xff]
  %v35 = vld [vmem:[%s0 + $0x20] sm:$0xff]
  %v36 = vld [vmem:[%s0 + $0x28] sm:$0xff]
  %v37 = vld [vmem:[%s0 + $0x30] sm:$0xff]
  %v38 = vld [vmem:[%s0 + $0x38] sm:$0xff]
  %v39 = vld [vmem:[%s0 + $0x40] sm:$0xff]
  %v40 = vld [vmem:[%s0 + $0x48] sm:$0xff]
  %v41 = vld [vmem:[%s0 + $0x50] sm:$0xff]
  %v42 = vld [vmem:[%s0 + $0x58] sm:$0xff]
  %v43 = vld [vmem:[%s0 + $0x60] sm:$0xff]
  %v44 = vld [vmem:[%s0 + $0x68] sm:$0xff]
  %v45 = vld [vmem:[%s0 + $0x70] sm:$0xff]
  %v46 = vld [vmem:[%s0 + $0x78] sm:$0xff]
  %v47 = vld [vmem:[%s0 + $0x80] sm:$0xf]
  %v48 = vld [vmem:[%s0 + $0x88] sm:$0xf]
  %v49 = vld [vmem:[%s0 + $0x90] sm:$0xf]
  %v50 = vld [vmem:[%s0 + $0x98] sm:$0xf]
  %v51 = vld [vmem:[%s2] sm:$0xff]
  %v52 = vld [vmem:[%s2 + $0x8] sm:$0xff]
  %v53 = vld [vmem:[%s2 + $0x10] sm:$0xff]
  %v54 = vld [vmem:[%s2 + $0x18] sm:$0xff]
  %v55 = vld [vmem:[%s2 + $0x20] sm:$0xff]
  %v56 = vld [vmem:[%s2 + $0x28] sm:$0xff]
  %v57 = vld [vmem:[%s2 + $0x30] sm:$0xff]
  %v58 = vld [vmem:[%s2 + $0x38] sm:$0xff]
  %60 = vset.pattern.permute.xlu0 0
  %61 = vperm.xlu0 %60, %v51
  %v62 = vpop.permute.xlu0 %61
  %65 = vset.pattern.permute.xlu0 0
  %66 = vperm.xlu0 %65, %v52
  %v67 = vpop.permute.xlu0 %66
  %70 = vset.pattern.permute.xlu0 0
  %71 = vperm.xlu0 %70, %v53
  %v72 = vpop.permute.xlu0 %71
  %75 = vset.pattern.permute.xlu0 0
  %76 = vperm.xlu0 %75, %v54
  %v77 = vpop.permute.xlu0 %76
  %80 = vset.pattern.permute.xlu0 0
  %81 = vperm.xlu0 %80, %v55
  %v82 = vpop.permute.xlu0 %81
  %85 = vset.pattern.permute.xlu0 0
  %86 = vperm.xlu0 %85, %v56
  %v87 = vpop.permute.xlu0 %86
  %90 = vset.pattern.permute.xlu0 0
  %91 = vperm.xlu0 %90, %v57
  %v92 = vpop.permute.xlu0 %91
  %95 = vset.pattern.permute.xlu0 0
  %96 = vperm.xlu0 %95, %v58
  %v97 = vpop.permute.xlu0 %96
  %vm99 = vcmask 293888
  %v101 = vsel %vm99, %v23, 0
  %v104 = vsel %vm99, %v24, 0
  %v107 = vsel %vm99, %v25, 0
  %v110 = vsel %vm99, %v26, 0
  %v113 = vsel %vm99, %v27, 0
  %v116 = vsel %vm99, %v28, 0
  %v119 = vsel %vm99, %v29, 0
  %v122 = vsel %vm99, %v30, 0
  %vm124 = vcmask 1043456
  %v126 = vsel %vm124, %v47, 0
  %v129 = vsel %vm124, %v48, 0
  %v132 = vsel %vm124, %v49, 0
  %v135 = vsel %vm124, %v50, 0
  %137 = vmatprep.subr.mxu0 %v32
  %138 = vmatpush1.msra.mxu0 %v31
  %139 = vmatprep.subr.mxu0 %v36
  %140 = vmatpush1.msra.mxu0 %v35
  %141 = vmatprep.subr.mxu0 %v40
  %142 = vmatpush1.msra.mxu0 %v39
  %143 = vmatprep.subr.mxu0 %v44
  %144 = vmatpush1.msra.mxu0 %v43
  %145 = vmatprep.subr.mxu0 %v129
  %146 = vmatpush1.msra.mxu0 %v126
  %147 = vmatprep.subr.mxu0 0.0
  %148 = vmatpush1.msra.mxu0 0.0
  %149 = vmatprep.subr.mxu0 0.0
  %150 = vmatpush1.msra.mxu0 0.0
  %151 = vmatprep.subr.mxu0 0.0
  %152 = vmatpush1.msra.mxu0 0.0
  %153 = vmatprep.subr.mxu0 0.0
  %154 = vmatpush1.msra.mxu0 0.0
  %155 = vmatprep.subr.mxu0 0.0
  %156 = vmatpush1.msra.mxu0 0.0
  %157 = vmatprep.subr.mxu0 0.0
  %158 = vmatpush1.msra.mxu0 0.0
  %159 = vmatprep.subr.mxu0 0.0
  %160 = vmatpush1.msra.mxu0 0.0
  %161 = vmatprep.subr.mxu0 0.0
  %162 = vmatpush1.msra.mxu0 0.0
  %163 = vmatprep.subr.mxu0 0.0
  %164 = vmatpush1.msra.mxu0 0.0
  %165 = vmatprep.subr.mxu0 0.0
  %166 = vmatpush1.msra.mxu0 0.0
  %167 = vmatprep.subr.mxu0 0.0
  %168 = vmatpush1.msra.mxu0 0.0
  %169 = vmatprep.subr.mxu0 0.0
  %170 = vmatpush1.msra.mxu0 0.0
  %171 = vmatprep.subr.mxu0 0.0
  %172 = vmatpush1.msra.mxu0 0.0
  %173 = vmatprep.subr.mxu0 0.0
  %174 = vmatpush1.msra.mxu0 0.0
  %175 = vmatprep.subr.mxu0 0.0
  %176 = vmatpush1.msra.mxu0 0.0
  %177 = vmatprep.subr.mxu0 0.0
  %178 = vmatpush1.msra.mxu0 0.0
  %179 = vmatprep.subr.mxu0 0.0
  %180 = vmatpush1.msra.mxu0 0.0
  %181 = vmatprep.subr.mxu0 0.0
  %182 = vmatpush1.msra.mxu0 0.0
  %183 = vmatprep.subr.mxu0 0.0
  %184 = vmatpush1.msra.mxu0 0.0
  %185 = vmatprep.subr.mxu0 0.0
  %186 = vmatpush1.msra.mxu0 0.0
  %187 = vmatprep.subr.mxu0 0.0
  %188 = vmatpush1.msra.mxu0 0.0
  %189 = vmatprep.subr.mxu0 0.0
  %190 = vmatpush1.msra.mxu0 0.0
  %191 = vmatprep.subr.mxu0 0.0
  %192 = vmatpush1.msra.mxu0 0.0
  %193 = vmatprep.subr.mxu0 0.0
  %194 = vmatpush1.msra.mxu0 0.0
  %195 = vmatprep.subr.mxu0 0.0
  %196 = vmatpush1.msra.mxu0 0.0
  %197 = vmatprep.subr.mxu0 0.0
  %198 = vmatpush1.msra.mxu0 0.0
  %199 = vmatprep.subr.mxu0 0.0
  %200 = vmatpush1.msra.mxu0 0.0
  %201 = vmatprep.mubr.f32.mxu0 0.0
  %202 = vmatmul.mubr.f32.gmra.mrb[0].mxu0 %v101
  %v203 = vpop.f32.mrb[0].mxu0
  %v204 = vadd.f32 %v62, %v203
  %v205 = vpop.f32.mrb[0].mxu0
  %v206 = vadd.f32 %v62, %v205
  %207 = vmatprep.mubr.f32.mxu0 0.0
  %208 = vmatmul.mubr.f32.gmra.mrb[0].mxu0 %v104
  %v209 = vpop.f32.mrb[0].mxu0
  %v210 = vadd.f32 %v67, %v209
  %v211 = vpop.f32.mrb[0].mxu0
  %v212 = vadd.f32 %v67, %v211
  %213 = vmatprep.mubr.f32.mxu0 0.0
  %214 = vmatmul.mubr.f32.gmra.mrb[0].mxu0 %v107
  %v215 = vpop.f32.mrb[0].mxu0
  %v216 = vadd.f32 %v72, %v215
  %v217 = vpop.f32.mrb[0].mxu0
  %v218 = vadd.f32 %v72, %v217
  %219 = vmatprep.mubr.f32.mxu0 0.0
  %220 = vmatmul.mubr.f32.gmra.mrb[0].mxu0 %v110
  %v221 = vpop.f32.mrb[0].mxu0
  %v222 = vadd.f32 %v77, %v221
  %v223 = vpop.f32.mrb[0].mxu0
  %v224 = vadd.f32 %v77, %v223
  %225 = vmatprep.mubr.f32.mxu0 0.0
  %226 = vmatmul.mubr.f32.gmra.mrb[0].mxu0 %v113
  %v227 = vpop.f32.mrb[0].mxu0
  %v228 = vadd.f32 %v82, %v227
  %v229 = vpop.f32.mrb[0].mxu0
  %v230 = vadd.f32 %v82, %v229
  %231 = vmatprep.mubr.f32.mxu0 0.0
  %232 = vmatmul.mubr.f32.gmra.mrb[0].mxu0 %v116
  %v233 = vpop.f32.mrb[0].mxu0
  %v234 = vadd.f32 %v87, %v233
  %v235 = vpop.f32.mrb[0].mxu0
  %v236 = vadd.f32 %v87, %v235
  %237 = vmatprep.mubr.f32.mxu0 0.0
  %238 = vmatmul.mubr.f32.gmra.mrb[0].mxu0 %v119
  %v239 = vpop.f32.mrb[0].mxu0
  %v240 = vadd.f32 %v92, %v239
  %v241 = vpop.f32.mrb[0].mxu0
  %v242 = vadd.f32 %v92, %v241
  %243 = vmatprep.mubr.f32.mxu0 0.0
  %244 = vmatmul.mubr.f32.gmra.mrb[0].mxu0 %v122
  %v245 = vpop.f32.mrb[0].mxu0
  %v246 = vadd.f32 %v97, %v245
  %v247 = vpop.f32.mrb[0].mxu0
  %v248 = vadd.f32 %v97, %v247
  %249 = vdwg.mxu0
  %250 = vmatprep.subr.mxu0 %v34
  %251 = vmatpush1.msra.mxu0 %v33
  %252 = vmatprep.subr.mxu0 %v38
  %253 = vmatpush1.msra.mxu0 %v37
  %254 = vmatprep.subr.mxu0 %v42
  %255 = vmatpush1.msra.mxu0 %v41
  %256 = vmatprep.subr.mxu0 %v46
  %257 = vmatpush1.msra.mxu0 %v45
  %258 = vmatprep.subr.mxu0 %v135
  %259 = vmatpush1.msra.mxu0 %v132
  %260 = vmatprep.subr.mxu0 0.0
  %261 = vmatpush1.msra.mxu0 0.0
  %262 = vmatprep.subr.mxu0 0.0
  %263 = vmatpush1.msra.mxu0 0.0
  %264 = vmatprep.subr.mxu0 0.0
  %265 = vmatpush1.msra.mxu0 0.0
  %266 = vmatprep.subr.mxu0 0.0
  %267 = vmatpush1.msra.mxu0 0.0
  %268 = vmatprep.subr.mxu0 0.0
  %269 = vmatpush1.msra.mxu0 0.0
  %270 = vmatprep.subr.mxu0 0.0
  %271 = vmatpush1.msra.mxu0 0.0
  %272 = vmatprep.subr.mxu0 0.0
  %273 = vmatpush1.msra.mxu0 0.0
  %274 = vmatprep.subr.mxu0 0.0
  %275 = vmatpush1.msra.mxu0 0.0
  %276 = vmatprep.subr.mxu0 0.0
  %277 = vmatpush1.msra.mxu0 0.0
  %278 = vmatprep.subr.mxu0 0.0
  %279 = vmatpush1.msra.mxu0 0.0
  %280 = vmatprep.subr.mxu0 0.0
  %281 = vmatpush1.msra.mxu0 0.0
  %282 = vmatprep.subr.mxu0 0.0
  %283 = vmatpush1.msra.mxu0 0.0
  %284 = vmatprep.subr.mxu0 0.0
  %285 = vmatpush1.msra.mxu0 0.0
  %286 = vmatprep.subr.mxu0 0.0
  %287 = vmatpush1.msra.mxu0 0.0
  %288 = vmatprep.subr.mxu0 0.0
  %289 = vmatpush1.msra.mxu0 0.0
  %290 = vmatprep.subr.mxu0 0.0
  %291 = vmatpush1.msra.mxu0 0.0
  %292 = vmatprep.subr.mxu0 0.0
  %293 = vmatpush1.msra.mxu0 0.0
  %294 = vmatprep.subr.mxu0 0.0
  %295 = vmatpush1.msra.mxu0 0.0
  %296 = vmatprep.subr.mxu0 0.0
  %297 = vmatpush1.msra.mxu0 0.0
  %298 = vmatprep.subr.mxu0 0.0
  %299 = vmatpush1.msra.mxu0 0.0
  %300 = vmatprep.subr.mxu0 0.0
  %301 = vmatpush1.msra.mxu0 0.0
  %302 = vmatprep.subr.mxu0 0.0
  %303 = vmatpush1.msra.mxu0 0.0
  %304 = vmatprep.subr.mxu0 0.0
  %305 = vmatpush1.msra.mxu0 0.0
  %306 = vmatprep.subr.mxu0 0.0
  %307 = vmatpush1.msra.mxu0 0.0
  %308 = vmatprep.subr.mxu0 0.0
  %309 = vmatpush1.msra.mxu0 0.0
  %310 = vmatprep.subr.mxu0 0.0
  %311 = vmatpush1.msra.mxu0 0.0
  %312 = vmatprep.subr.mxu0 0.0
  %313 = vmatpush1.msra.mxu0 0.0
  %314 = vmatprep.mubr.f32.mxu0 0.0
  %315 = vmatmul.mubr.f32.gmra.mrb[0].mxu0 %v101
  %v316 = vpop.f32.mrb[0].mxu0
  %v317 = vadd.f32 %v62, %v316
  %v318 = vpop.f32.mrb[0].mxu0
  %v319 = vadd.f32 %v62, %v318
  %320 = vmatprep.mubr.f32.mxu0 0.0
  %321 = vmatmul.mubr.f32.gmra.mrb[0].mxu0 %v104
  %v322 = vpop.f32.mrb[0].mxu0
  %v323 = vadd.f32 %v67, %v322
  %v324 = vpop.f32.mrb[0].mxu0
  %v325 = vadd.f32 %v67, %v324
  %326 = vmatprep.mubr.f32.mxu0 0.0
  %327 = vmatmul.mubr.f32.gmra.mrb[0].mxu0 %v107
  %v328 = vpop.f32.mrb[0].mxu0
  %v329 = vadd.f32 %v72, %v328
  %v330 = vpop.f32.mrb[0].mxu0
  %v331 = vadd.f32 %v72, %v330
  %332 = vmatprep.mubr.f32.mxu0 0.0
  %333 = vmatmul.mubr.f32.gmra.mrb[0].mxu0 %v110
  %v334 = vpop.f32.mrb[0].mxu0
  %v335 = vadd.f32 %v77, %v334
  %v336 = vpop.f32.mrb[0].mxu0
  %v337 = vadd.f32 %v77, %v336
  %338 = vmatprep.mubr.f32.mxu0 0.0
  %339 = vmatmul.mubr.f32.gmra.mrb[0].mxu0 %v113
  %v340 = vpop.f32.mrb[0].mxu0
  %v341 = vadd.f32 %v82, %v340
  %v342 = vpop.f32.mrb[0].mxu0
  %v343 = vadd.f32 %v82, %v342
  %344 = vmatprep.mubr.f32.mxu0 0.0
  %345 = vmatmul.mubr.f32.gmra.mrb[0].mxu0 %v116
  %v346 = vpop.f32.mrb[0].mxu0
  %v347 = vadd.f32 %v87, %v346
  %v348 = vpop.f32.mrb[0].mxu0
  %v349 = vadd.f32 %v87, %v348
  %350 = vmatprep.mubr.f32.mxu0 0.0
  %351 = vmatmul.mubr.f32.gmra.mrb[0].mxu0 %v119
  %v352 = vpop.f32.mrb[0].mxu0
  %v353 = vadd.f32 %v92, %v352
  %v354 = vpop.f32.mrb[0].mxu0
  %v355 = vadd.f32 %v92, %v354
  %356 = vmatprep.mubr.f32.mxu0 0.0
  %357 = vmatmul.mubr.f32.gmra.mrb[0].mxu0 %v122
  %v358 = vpop.f32.mrb[0].mxu0
  %v359 = vadd.f32 %v97, %v358
  %v360 = vpop.f32.mrb[0].mxu0
  %v361 = vadd.f32 %v97, %v360
  %362 = vdwg.mxu0
  %v363 = vmax.f32 %v204, 0.0
  %v364 = vmax.f32 %v206, 0.0
  %v365 = vmax.f32 %v317, 0.0
  %v366 = vmax.f32 %v319, 0.0
  %v367 = vmax.f32 %v210, 0.0
  %v368 = vmax.f32 %v212, 0.0
  %v369 = vmax.f32 %v323, 0.0
  %v370 = vmax.f32 %v325, 0.0
  %v371 = vmax.f32 %v216, 0.0
  %v372 = vmax.f32 %v218, 0.0
  %v373 = vmax.f32 %v329, 0.0
  %v374 = vmax.f32 %v331, 0.0
  %v375 = vmax.f32 %v222, 0.0
  %v376 = vmax.f32 %v224, 0.0
  %v377 = vmax.f32 %v335, 0.0
  %v378 = vmax.f32 %v337, 0.0
  %v379 = vmax.f32 %v228, 0.0
  %v380 = vmax.f32 %v230, 0.0
  %v381 = vmax.f32 %v341, 0.0
  %v382 = vmax.f32 %v343, 0.0
  %v383 = vmax.f32 %v234, 0.0
  %v384 = vmax.f32 %v236, 0.0
  %v385 = vmax.f32 %v347, 0.0
  %v386 = vmax.f32 %v349, 0.0
  %v387 = vmax.f32 %v240, 0.0
  %v388 = vmax.f32 %v242, 0.0
  %v389 = vmax.f32 %v353, 0.0
  %v390 = vmax.f32 %v355, 0.0
  %v391 = vmax.f32 %v246, 0.0
  %v392 = vmax.f32 %v248, 0.0
  %v393 = vmax.f32 %v359, 0.0
  %v394 = vmax.f32 %v361, 0.0
  %v395 = vld [vmem:[%s3] sm:$0xff]
  %v396 = vld [vmem:[%s3 + $0x8] sm:$0xff]
  %v397 = vld [vmem:[%s3 + $0x10] sm:$0xff]
  %v398 = vld [vmem:[%s3 + $0x18] sm:$0xff]
  %v399 = vld [vmem:[%s3 + $0x20] sm:$0xff]
  %v400 = vld [vmem:[%s3 + $0x28] sm:$0xff]
  %v401 = vld [vmem:[%s3 + $0x30] sm:$0xff]
  %v402 = vld [vmem:[%s3 + $0x38] sm:$0xff]
  %v403 = vld [vmem:[%s3 + $0x40] sm:$0xff]
  %v404 = vld [vmem:[%s3 + $0x48] sm:$0xff]
  %v405 = vld [vmem:[%s3 + $0x50] sm:$0xff]
  %v406 = vld [vmem:[%s3 + $0x58] sm:$0xff]
  %v407 = vld [vmem:[%s3 + $0x60] sm:$0xff]
  %v408 = vld [vmem:[%s3 + $0x68] sm:$0xff]
  %v409 = vld [vmem:[%s3 + $0x70] sm:$0xff]
  %v410 = vld [vmem:[%s3 + $0x78] sm:$0xff]
  %v411 = vld [vmem:[%s3 + $0x80] sm:$0xff]
  %v412 = vld [vmem:[%s3 + $0x88] sm:$0xff]
  %v413 = vld [vmem:[%s3 + $0x90] sm:$0xff]
  %v414 = vld [vmem:[%s3 + $0x98] sm:$0xff]
  %v415 = vld [vmem:[%s3 + $0xa0] sm:$0xff]
  %v416 = vld [vmem:[%s3 + $0xa8] sm:$0xff]
  %v417 = vld [vmem:[%s3 + $0xb0] sm:$0xff]
  %v418 = vld [vmem:[%s3 + $0xb8] sm:$0xff]
  %v419 = vld [vmem:[%s3 + $0xc0] sm:$0xff]
  %v420 = vld [vmem:[%s3 + $0xc8] sm:$0xff]
  %v421 = vld [vmem:[%s3 + $0xd0] sm:$0xff]
  %v422 = vld [vmem:[%s3 + $0xd8] sm:$0xff]
  %v423 = vld [vmem:[%s3 + $0xe0] sm:$0xff]
  %v424 = vld [vmem:[%s3 + $0xe8] sm:$0xff]
  %v425 = vld [vmem:[%s3 + $0xf0] sm:$0xff]
  %v426 = vld [vmem:[%s3 + $0xf8] sm:$0xff]
  %v427 = vld [vmem:[%s3 + $0x100] sm:$0xff]
  %v428 = vld [vmem:[%s3 + $0x108] sm:$0xff]
  %v429 = vld [vmem:[%s3 + $0x110] sm:$0xff]
  %v430 = vld [vmem:[%s3 + $0x118] sm:$0xff]
  %v431 = vld [vmem:[%s3 + $0x120] sm:$0xff]
  %v432 = vld [vmem:[%s3 + $0x128] sm:$0xff]
  %v433 = vld [vmem:[%s3 + $0x130] sm:$0xff]
  %v434 = vld [vmem:[%s3 + $0x138] sm:$0xff]
  %v435 = vld [vmem:[%s3 + $0x140] sm:$0xff]
  %v436 = vld [vmem:[%s3 + $0x148] sm:$0xff]
  %v437 = vld [vmem:[%s3 + $0x150] sm:$0xff]
  %v438 = vld [vmem:[%s3 + $0x158] sm:$0xff]
  %v439 = vld [vmem:[%s3 + $0x160] sm:$0xff]
  %v440 = vld [vmem:[%s3 + $0x168] sm:$0xff]
  %v441 = vld [vmem:[%s3 + $0x170] sm:$0xff]
  %v442 = vld [vmem:[%s3 + $0x178] sm:$0xff]
  %v443 = vld [vmem:[%s3 + $0x180] sm:$0xff]
  %v444 = vld [vmem:[%s3 + $0x188] sm:$0xff]
  %v445 = vld [vmem:[%s3 + $0x190] sm:$0xff]
  %v446 = vld [vmem:[%s3 + $0x198] sm:$0xff]
  %v447 = vld [vmem:[%s3 + $0x1a0] sm:$0xff]
  %v448 = vld [vmem:[%s3 + $0x1a8] sm:$0xff]
  %v449 = vld [vmem:[%s3 + $0x1b0] sm:$0xff]
  %v450 = vld [vmem:[%s3 + $0x1b8] sm:$0xff]
  %v451 = vld [vmem:[%s3 + $0x1c0] sm:$0xff]
  %v452 = vld [vmem:[%s3 + $0x1c8] sm:$0xff]
  %v453 = vld [vmem:[%s3 + $0x1d0] sm:$0xff]
  %v454 = vld [vmem:[%s3 + $0x1d8] sm:$0xff]
  %v455 = vld [vmem:[%s3 + $0x1e0] sm:$0xff]
  %v456 = vld [vmem:[%s3 + $0x1e8] sm:$0xff]
  %v457 = vld [vmem:[%s3 + $0x1f0] sm:$0xff]
  %v458 = vld [vmem:[%s3 + $0x1f8] sm:$0xff]
  %459 = vmatprep.subr.mxu0 0.0
  %460 = vmatpush1.msra.mxu0 %v395
  %461 = vmatprep.subr.mxu0 0.0
  %462 = vmatpush1.msra.mxu0 %v396
  %463 = vmatprep.subr.mxu0 0.0
  %464 = vmatpush1.msra.mxu0 %v397
  %465 = vmatprep.subr.mxu0 0.0
  %466 = vmatpush1.msra.mxu0 %v398
  %467 = vmatprep.subr.mxu0 0.0
  %468 = vmatpush1.msra.mxu0 %v399
  %469 = vmatprep.subr.mxu0 0.0
  %470 = vmatpush1.msra.mxu0 %v400
  %471 = vmatprep.subr.mxu0 0.0
  %472 = vmatpush1.msra.mxu0 %v401
  %473 = vmatprep.subr.mxu0 0.0
  %474 = vmatpush1.msra.mxu0 %v402
  %475 = vmatprep.subr.mxu0 0.0
  %476 = vmatpush1.msra.mxu0 %v403
  %477 = vmatprep.subr.mxu0 0.0
  %478 = vmatpush1.msra.mxu0 %v404
  %479 = vmatprep.subr.mxu0 0.0
  %480 = vmatpush1.msra.mxu0 %v405
  %481 = vmatprep.subr.mxu0 0.0
  %482 = vmatpush1.msra.mxu0 %v406
  %483 = vmatprep.subr.mxu0 0.0
  %484 = vmatpush1.msra.mxu0 %v407
  %485 = vmatprep.subr.mxu0 0.0
  %486 = vmatpush1.msra.mxu0 %v408
  %487 = vmatprep.subr.mxu0 0.0
  %488 = vmatpush1.msra.mxu0 %v409
  %489 = vmatprep.subr.mxu0 0.0
  %490 = vmatpush1.msra.mxu0 %v410
  %491 = vmatprep.subr.mxu0 0.0
  %492 = vmatpush1.msra.mxu0 %v411
  %493 = vmatprep.subr.mxu0 0.0
  %494 = vmatpush1.msra.mxu0 %v412
  %495 = vmatprep.subr.mxu0 0.0
  %496 = vmatpush1.msra.mxu0 %v413
  %497 = vmatprep.subr.mxu0 0.0
  %498 = vmatpush1.msra.mxu0 %v414
  %499 = vmatprep.subr.mxu0 0.0
  %500 = vmatpush1.msra.mxu0 %v415
  %501 = vmatprep.subr.mxu0 0.0
  %502 = vmatpush1.msra.mxu0 %v416
  %503 = vmatprep.subr.mxu0 0.0
  %504 = vmatpush1.msra.mxu0 %v417
  %505 = vmatprep.subr.mxu0 0.0
  %506 = vmatpush1.msra.mxu0 %v418
  %507 = vmatprep.subr.mxu0 0.0
  %508 = vmatpush1.msra.mxu0 %v419
  %509 = vmatprep.subr.mxu0 0.0
  %510 = vmatpush1.msra.mxu0 %v420
  %511 = vmatprep.subr.mxu0 0.0
  %512 = vmatpush1.msra.mxu0 %v421
  %513 = vmatprep.subr.mxu0 0.0
  %514 = vmatpush1.msra.mxu0 %v422
  %515 = vmatprep.subr.mxu0 0.0
  %516 = vmatpush1.msra.mxu0 %v423
  %517 = vmatprep.subr.mxu0 0.0
  %518 = vmatpush1.msra.mxu0 %v424
  %519 = vmatprep.subr.mxu0 0.0
  %520 = vmatpush1.msra.mxu0 %v425
  %521 = vmatprep.subr.mxu0 0.0
  %522 = vmatpush1.msra.mxu0 %v426
  %523 = vmatprep.mubr.f32.mxu0 %v364
  %524 = vmatmul.mubr.f32.gmra.mrb[0].mxu0 %v363
  %v525 = vpop.f32.mrb[0].mxu0
  %v526 = vadd.f32 0.0, %v525
  %v527 = vpop.f32.mrb[0].mxu0
  %528 = vmatprep.mubr.f32.mxu0 %v368
  %529 = vmatmul.mubr.f32.gmra.mrb[0].mxu0 %v367
  %v530 = vpop.f32.mrb[0].mxu0
  %v531 = vadd.f32 0.0, %v530
  %v532 = vpop.f32.mrb[0].mxu0
  %533 = vmatprep.mubr.f32.mxu0 %v372
  %534 = vmatmul.mubr.f32.gmra.mrb[0].mxu0 %v371
  %v535 = vpop.f32.mrb[0].mxu0
  %v536 = vadd.f32 0.0, %v535
  %v537 = vpop.f32.mrb[0].mxu0
  %538 = vmatprep.mubr.f32.mxu0 %v376
  %539 = vmatmul.mubr.f32.gmra.mrb[0].mxu0 %v375
  %v540 = vpop.f32.mrb[0].mxu0
  %v541 = vadd.f32 0.0, %v540
  %v542 = vpop.f32.mrb[0].mxu0
  %543 = vmatprep.mubr.f32.mxu0 %v380
  %544 = vmatmul.mubr.f32.gmra.mrb[0].mxu0 %v379
  %v545 = vpop.f32.mrb[0].mxu0
  %v546 = vadd.f32 0.0, %v545
  %v547 = vpop.f32.mrb[0].mxu0
  %548 = vmatprep.mubr.f32.mxu0 %v384
  %549 = vmatmul.mubr.f32.gmra.mrb[0].mxu0 %v383
  %v550 = vpop.f32.mrb[0].mxu0
  %v551 = vadd.f32 0.0, %v550
  %v552 = vpop.f32.mrb[0].mxu0
  %553 = vmatprep.mubr.f32.mxu0 %v388
  %554 = vmatmul.mubr.f32.gmra.mrb[0].mxu0 %v387
  %v555 = vpop.f32.mrb[0].mxu0
  %v556 = vadd.f32 0.0, %v555
  %v557 = vpop.f32.mrb[0].mxu0
  %558 = vmatprep.mubr.f32.mxu0 %v392
  %559 = vmatmul.mubr.f32.gmra.mrb[0].mxu0 %v391
  %v560 = vpop.f32.mrb[0].mxu0
  %v561 = vadd.f32 0.0, %v560
  %v562 = vpop.f32.mrb[0].mxu0
  %563 = vdwg.mxu0
  %564 = vmatprep.subr.mxu0 0.0
  %565 = vmatpush1.msra.mxu0 %v427
  %566 = vmatprep.subr.mxu0 0.0
  %567 = vmatpush1.msra.mxu0 %v428
  %568 = vmatprep.subr.mxu0 0.0
  %569 = vmatpush1.msra.mxu0 %v429
  %570 = vmatprep.subr.mxu0 0.0
  %571 = vmatpush1.msra.mxu0 %v430
  %572 = vmatprep.subr.mxu0 0.0
  %573 = vmatpush1.msra.mxu0 %v431
  %574 = vmatprep.subr.mxu0 0.0
  %575 = vmatpush1.msra.mxu0 %v432
  %576 = vmatprep.subr.mxu0 0.0
  %577 = vmatpush1.msra.mxu0 %v433
  %578 = vmatprep.subr.mxu0 0.0
  %579 = vmatpush1.msra.mxu0 %v434
  %580 = vmatprep.subr.mxu0 0.0
  %581 = vmatpush1.msra.mxu0 %v435
  %582 = vmatprep.subr.mxu0 0.0
  %583 = vmatpush1.msra.mxu0 %v436
  %584 = vmatprep.subr.mxu0 0.0
  %585 = vmatpush1.msra.mxu0 %v437
  %586 = vmatprep.subr.mxu0 0.0
  %587 = vmatpush1.msra.mxu0 %v438
  %588 = vmatprep.subr.mxu0 0.0
  %589 = vmatpush1.msra.mxu0 %v439
  %590 = vmatprep.subr.mxu0 0.0
  %591 = vmatpush1.msra.mxu0 %v440
  %592 = vmatprep.subr.mxu0 0.0
  %593 = vmatpush1.msra.mxu0 %v441
  %594 = vmatprep.subr.mxu0 0.0
  %595 = vmatpush1.msra.mxu0 %v442
  %596 = vmatprep.subr.mxu0 0.0
  %597 = vmatpush1.msra.mxu0 %v443
  %598 = vmatprep.subr.mxu0 0.0
  %599 = vmatpush1.msra.mxu0 %v444
  %600 = vmatprep.subr.mxu0 0.0
  %601 = vmatpush1.msra.mxu0 %v445
  %602 = vmatprep.subr.mxu0 0.0
  %603 = vmatpush1.msra.mxu0 %v446
  %604 = vmatprep.subr.mxu0 0.0
  %605 = vmatpush1.msra.mxu0 %v447
  %606 = vmatprep.subr.mxu0 0.0
  %607 = vmatpush1.msra.mxu0 %v448
  %608 = vmatprep.subr.mxu0 0.0
  %609 = vmatpush1.msra.mxu0 %v449
  %610 = vmatprep.subr.mxu0 0.0
  %611 = vmatpush1.msra.mxu0 %v450
  %612 = vmatprep.subr.mxu0 0.0
  %613 = vmatpush1.msra.mxu0 %v451
  %614 = vmatprep.subr.mxu0 0.0
  %615 = vmatpush1.msra.mxu0 %v452
  %616 = vmatprep.subr.mxu0 0.0
  %617 = vmatpush1.msra.mxu0 %v453
  %618 = vmatprep.subr.mxu0 0.0
  %619 = vmatpush1.msra.mxu0 %v454
  %620 = vmatprep.subr.mxu0 0.0
  %621 = vmatpush1.msra.mxu0 %v455
  %622 = vmatprep.subr.mxu0 0.0
  %623 = vmatpush1.msra.mxu0 %v456
  %624 = vmatprep.subr.mxu0 0.0
  %625 = vmatpush1.msra.mxu0 %v457
  %626 = vmatprep.subr.mxu0 0.0
  %627 = vmatpush1.msra.mxu0 %v458
  %628 = vmatprep.mubr.f32.mxu0 %v366
  %629 = vmatmul.mubr.f32.gmra.mrb[0].mxu0 %v365
  %v630 = vpop.f32.mrb[0].mxu0
  %v631 = vadd.f32 %v526, %v630
  %v632 = vpop.f32.mrb[0].mxu0
  %633 = vmatprep.mubr.f32.mxu0 %v370
  %634 = vmatmul.mubr.f32.gmra.mrb[0].mxu0 %v369
  %v635 = vpop.f32.mrb[0].mxu0
  %v636 = vadd.f32 %v531, %v635
  %v637 = vpop.f32.mrb[0].mxu0
  %638 = vmatprep.mubr.f32.mxu0 %v374
  %639 = vmatmul.mubr.f32.gmra.mrb[0].mxu0 %v373
  %v640 = vpop.f32.mrb[0].mxu0
  %v641 = vadd.f32 %v536, %v640
  %v642 = vpop.f32.mrb[0].mxu0
  %643 = vmatprep.mubr.f32.mxu0 %v378
  %644 = vmatmul.mubr.f32.gmra.mrb[0].mxu0 %v377
  %v645 = vpop.f32.mrb[0].mxu0
  %v646 = vadd.f32 %v541, %v645
  %v647 = vpop.f32.mrb[0].mxu0
  %648 = vmatprep.mubr.f32.mxu0 %v382
  %649 = vmatmul.mubr.f32.gmra.mrb[0].mxu0 %v381
  %v650 = vpop.f32.mrb[0].mxu0
  %v651 = vadd.f32 %v546, %v650
  %v652 = vpop.f32.mrb[0].mxu0
  %653 = vmatprep.mubr.f32.mxu0 %v386
  %654 = vmatmul.mubr.f32.gmra.mrb[0].mxu0 %v385
  %v655 = vpop.f32.mrb[0].mxu0
  %v656 = vadd.f32 %v551, %v655
  %v657 = vpop.f32.mrb[0].mxu0
  %658 = vmatprep.mubr.f32.mxu0 %v390
  %659 = vmatmul.mubr.f32.gmra.mrb[0].mxu0 %v389
  %v660 = vpop.f32.mrb[0].mxu0
  %v661 = vadd.f32 %v556, %v660
  %v662 = vpop.f32.mrb[0].mxu0
  %663 = vmatprep.mubr.f32.mxu0 %v394
  %664 = vmatmul.mubr.f32.gmra.mrb[0].mxu0 %v393
  %v665 = vpop.f32.mrb[0].mxu0
  %v666 = vadd.f32 %v561, %v665
  %v667 = vpop.f32.mrb[0].mxu0
  %668 = vdwg.mxu0
  %v669 = vld [vmem:[%s4] sm:$0xff]
  %v670 = vld [vmem:[%s4 + $0x8] sm:$0x3]
  %v671 = vld [vmem:[%s5] sm:$0xff]
  %v672 = vld [vmem:[%s5 + $0x8] sm:$0x3]
  %674 = vset.pattern.permute.xlu0 0
  %675 = vperm.xlu0 %674, %v671
  %v676 = vpop.permute.xlu0 %675
  %679 = vset.pattern.permute.xlu0 0
  %680 = vperm.xlu0 %679, %v672
  %v681 = vpop.permute.xlu0 %680
  %vm683 = vcmask 523264
  %v685 = vsel %vm683, %v669, 0
  %v688 = vsel %vm683, %v670, 0
  %690 = vmatprep.subr.mxu0 0.0
  %691 = vmatpush1.msra.mxu0 %v631
  %692 = vmatprep.subr.mxu0 0.0
  %693 = vmatpush1.msra.mxu0 %v636
  %694 = vmatprep.subr.mxu0 0.0
  %695 = vmatpush1.msra.mxu0 %v641
  %696 = vmatprep.subr.mxu0 0.0
  %697 = vmatpush1.msra.mxu0 %v646
  %698 = vmatprep.subr.mxu0 0.0
  %699 = vmatpush1.msra.mxu0 %v651
  %700 = vmatprep.subr.mxu0 0.0
  %701 = vmatpush1.msra.mxu0 %v656
  %702 = vmatprep.subr.mxu0 0.0
  %703 = vmatpush1.msra.mxu0 %v661
  %704 = vmatprep.subr.mxu0 0.0
  %705 = vmatpush1.msra.mxu0 %v666
  %706 = vmatprep.subr.mxu0 0.0
  %707 = vmatpush1.msra.mxu0 0.0
  %708 = vmatprep.subr.mxu0 0.0
  %709 = vmatpush1.msra.mxu0 0.0
  %710 = vmatprep.subr.mxu0 0.0
  %711 = vmatpush1.msra.mxu0 0.0
  %712 = vmatprep.subr.mxu0 0.0
  %713 = vmatpush1.msra.mxu0 0.0
  %714 = vmatprep.subr.mxu0 0.0
  %715 = vmatpush1.msra.mxu0 0.0
  %716 = vmatprep.subr.mxu0 0.0
  %717 = vmatpush1.msra.mxu0 0.0
  %718 = vmatprep.subr.mxu0 0.0
  %719 = vmatpush1.msra.mxu0 0.0
  %720 = vmatprep.subr.mxu0 0.0
  %721 = vmatpush1.msra.mxu0 0.0
  %722 = vmatprep.subr.mxu0 0.0
  %723 = vmatpush1.msra.mxu0 0.0
  %724 = vmatprep.subr.mxu0 0.0
  %725 = vmatpush1.msra.mxu0 0.0
  %726 = vmatprep.subr.mxu0 0.0
  %727 = vmatpush1.msra.mxu0 0.0
  %728 = vmatprep.subr.mxu0 0.0
  %729 = vmatpush1.msra.mxu0 0.0
  %730 = vmatprep.subr.mxu0 0.0
  %731 = vmatpush1.msra.mxu0 0.0
  %732 = vmatprep.subr.mxu0 0.0
  %733 = vmatpush1.msra.mxu0 0.0
  %734 = vmatprep.subr.mxu0 0.0
  %735 = vmatpush1.msra.mxu0 0.0
  %736 = vmatprep.subr.mxu0 0.0
  %737 = vmatpush1.msra.mxu0 0.0
  %738 = vmatprep.subr.mxu0 0.0
  %739 = vmatpush1.msra.mxu0 0.0
  %740 = vmatprep.subr.mxu0 0.0
  %741 = vmatpush1.msra.mxu0 0.0
  %742 = vmatprep.subr.mxu0 0.0
  %743 = vmatpush1.msra.mxu0 0.0
  %744 = vmatprep.subr.mxu0 0.0
  %745 = vmatpush1.msra.mxu0 0.0
  %746 = vmatprep.subr.mxu0 0.0
  %747 = vmatpush1.msra.mxu0 0.0
  %748 = vmatprep.subr.mxu0 0.0
  %749 = vmatpush1.msra.mxu0 0.0
  %750 = vmatprep.subr.mxu0 0.0
  %751 = vmatpush1.msra.mxu0 0.0
  %752 = vmatprep.subr.mxu0 0.0
  %753 = vmatpush1.msra.mxu0 0.0
  %754 = vmatprep.mubr.f32.mxu0 0.0
  %755 = vmatmul.mubr.f32.gmra.mrb[0].mxu0 %v685
  %v756 = vpop.f32.mrb[0].mxu0
  %v757 = vadd.f32 %v676, %v756
  %v758 = vpop.f32.mrb[0].mxu0
  %759 = vmatprep.mubr.f32.mxu0 0.0
  %760 = vmatmul.mubr.f32.gmra.mrb[0].mxu0 %v688
  %v761 = vpop.f32.mrb[0].mxu0
  %v762 = vadd.f32 %v681, %v761
  %v763 = vpop.f32.mrb[0].mxu0
  %764 = vdwg.mxu0
  %vm765 = vcmask 15360
  %766 = vst.msk [vmem:[%s6] sm:$0xff] %vm765, %v757
  %vm767 = vcmask 9216
  %768 = vst.msk [vmem:[%s6 + $0x8] sm:$0x3] %vm767, %v762
  // Predicated region
  $region26: #{model_forward.1} parent=0 // pred_check
    _
  $region27: #{model_forward.1} parent=0 // pred_check_branch
    %770 = sbr.rel (0) target = $region29
  $region28: #{model_forward.1} parent=0 // pred_region
    _
  $region29: #{model_forward.1} parent=0 // pred_fallthru
    _
  // Predicated region
  $region30: #{model_forward.1} parent=0 // pred_check
    _
  $region31: #{model_forward.1} parent=0 // pred_check_branch
    %772 = sbr.rel (0) target = $region33
  $region32: #{model_forward.1} parent=0 // pred_region
    _
  $region33: #{model_forward.1} parent=0 // pred_fallthru
    _

</llo_original>
